<compile_context>
chip_gen: v7x
topology: tpu7x:2x2x1
jax: 0.10.0
libtpu: 0.0.40
codegen_flags: <defaults>
</compile_context>

<pallas_src>
import jax
import jax.numpy as jnp
from jax.experimental import pallas as pl
from jax.experimental.pallas import tpu as pltpu

INPUT_SIZE = 2048   # `input_size` in the PyTorch module
NUM_CLASSES = 8     # stand-in for len(label_dict)

_NEG_BIG = -1e30    # padded-class bias: exp(NEG_BIG - m) == 0 in f32


def _sentiment_kernel(x_ref, w_ref, b_ref, o_ref):
    """Fused Linear + LogSoftmax for one batch tile.

    x_ref : (TB, D)     bf16 VMEM   activations
    w_ref : (C_pad, D)  bf16 VMEM   weight in natural (out, in) layout
    b_ref : (1, C_pad)  f32  VMEM   bias, padded lanes = _NEG_BIG
    o_ref : (TB, C_pad) f32  VMEM   log-probabilities (padded lanes garbage)
    """
    x = x_ref[...]
    w = w_ref[...]
    b = b_ref[...]

    # logits = x @ W^T + b : contract last dims of both operands (lane-dense
    # MXU feed), f32 accumulation.
    logits = jax.lax.dot_general(
        x, w,
        dimension_numbers=(((1,), (1,)), ((), ())),
        preferred_element_type=jnp.float32,
    ) + b                                              # (TB, C_pad) f32

    # LogSoftmax(dim=1): numerically stable log-sum-exp along the class axis.
    # Padded lanes have logit ~ -1e30 -> exp == 0, so they drop out of the sum.
    m = jnp.max(logits, axis=-1, keepdims=True)
    shifted = logits - m
    lse = jnp.log(jnp.sum(jnp.exp(shifted), axis=-1, keepdims=True))
    o_ref[...] = shifted - lse


def sentiment_classifier_forward(x, weight, bias, *, tb=512):
    """x: (B, D), weight: (C, D), bias: (C,) -> (B, C) log-probs (f32)."""
    B, D = x.shape
    C = weight.shape[0]
    C_pad = max(128, ((C + 127) // 128) * 128)

    # Lane-dense weight: keep natural (C, D) layout, zero-pad the class rows.
    w_p = jnp.zeros((C_pad, D), jnp.bfloat16).at[:C, :].set(
        weight.astype(jnp.bfloat16))
    # Bias padded with a large negative so padded classes vanish in the LSE.
    b_p = jnp.full((1, C_pad), _NEG_BIG, jnp.float32).at[0, :C].set(
        bias.astype(jnp.float32))

    x_bf = x.astype(jnp.bfloat16)
    if B <= tb:
        TB, Bp = B, B
        x_p = x_bf
    else:
        TB = tb
        Bp = pl.cdiv(B, TB) * TB
        x_p = jnp.zeros((Bp, D), jnp.bfloat16).at[:B, :].set(x_bf)

    out = pl.pallas_call(
        _sentiment_kernel,
        out_shape=jax.ShapeDtypeStruct((Bp, C_pad), jnp.float32),
        grid=(Bp // TB,),
        in_specs=[
            pl.BlockSpec((TB, D), lambda i: (i, 0)),        # streamed batch tile
            pl.BlockSpec((C_pad, D), lambda i: (0, 0)),     # resident weight
            pl.BlockSpec((1, C_pad), lambda i: (0, 0)),     # resident bias
        ],
        out_specs=pl.BlockSpec((TB, C_pad), lambda i: (i, 0)),
        compiler_params=pltpu.CompilerParams(
            dimension_semantics=("parallel",),
        ),
    )(x_p, w_p, b_p)

    return out[:B, :C]


if __name__ == "__main__":
    key = jax.random.PRNGKey(0)
    k_x, k_w, k_b = jax.random.split(key, 3)

    B = 2
    x = jax.random.normal(k_x, (B, INPUT_SIZE), dtype=jnp.float32)

    # Deterministic init mimicking nn.Linear default: U(-1/sqrt(D), 1/sqrt(D)).
    bound = 1.0 / (INPUT_SIZE ** 0.5)
    weight = jax.random.uniform(
        k_w, (NUM_CLASSES, INPUT_SIZE), dtype=jnp.float32,
        minval=-bound, maxval=bound)
    bias = jax.random.uniform(
        k_b, (NUM_CLASSES,), dtype=jnp.float32, minval=-bound, maxval=bound)

    out = sentiment_classifier_forward(x, weight, bias)
    out = jax.block_until_ready(out)

    # Pure-JAX f32 reference (Linear + LogSoftmax); kernel matmul is bf16 so
    # use a correspondingly loose tolerance.
    ref = jax.nn.log_softmax(x @ weight.T + bias, axis=1)
    assert out.shape == (B, NUM_CLASSES)
    assert bool(jnp.isfinite(out).all()), "non-finite output"
    assert jnp.allclose(out, ref, atol=5e-2, rtol=5e-2), "mismatch vs reference"

    print("KERNEL_OK")
</pallas_src>

<mosaic_0001>
module attributes {stable_mosaic.version = 11 : i64} {
  func.func @_sentiment_kernel(%arg0: i32, %arg1: memref<2x2048xbf16, #tpu.memory_space<vmem>>, %arg2: memref<128x2048xbf16, #tpu.memory_space<vmem>>, %arg3: memref<1x128xf32, #tpu.memory_space<vmem>>, %arg4: memref<2x128xf32, #tpu.memory_space<vmem>>) attributes {dimension_semantics = [#tpu.dimension_semantics<parallel>], iteration_bounds = array<i64: 1>, scalar_prefetch = 0 : i64, scratch_operands = 0 : i64, tpu.core_type = #tpu.core_type<tc>, window_params = [{transform_indices = @transform_0, window_bounds = array<i64: 2, 2048>}, {pipeline_mode = #tpu.pipeline_mode<synchronous>, transform_indices = @transform_1, window_bounds = array<i64: 128, 2048>}, {pipeline_mode = #tpu.pipeline_mode<synchronous>, transform_indices = @transform_2, window_bounds = array<i64: 1, 128>}, {transform_indices = @transform_3, window_bounds = array<i64: 2, 128>}]} {
    %c0 = arith.constant 0 : index
    %c0_0 = arith.constant 0 : index
    %0 = vector.load %arg1[%c0, %c0_0] : memref<2x2048xbf16, #tpu.memory_space<vmem>>, vector<2x2048xbf16>
    %c0_1 = arith.constant 0 : index
    %c0_2 = arith.constant 0 : index
    %1 = vector.load %arg2[%c0_1, %c0_2] : memref<128x2048xbf16, #tpu.memory_space<vmem>>, vector<128x2048xbf16>
    %c0_3 = arith.constant 0 : index
    %c0_4 = arith.constant 0 : index
    %2 = vector.load %arg3[%c0_3, %c0_4] : memref<1x128xf32, #tpu.memory_space<vmem>>, vector<1x128xf32>
    %cst = arith.constant dense<0.000000e+00> : vector<2x128xf32>
    %3 = tpu.matmul %0, %1, %cst {dimension_numbers = #tpu.dot_dimension_numbers<[1], [1], [0], [0], [0, 0, 1, 0], [], []>} : vector<2x2048xbf16>, vector<128x2048xbf16>, vector<2x128xf32> -> vector<2x128xf32>
    %4 = vector.broadcast %2 : vector<1x128xf32> to vector<2x128xf32>
    %5 = arith.addf %3, %4 : vector<2x128xf32>
    %cst_5 = arith.constant dense<0xFF800000> : vector<2xf32>
    %6 = vector.multi_reduction <maximumf>, %5, %cst_5 [1] : vector<2x128xf32> to vector<2xf32>
    %7 = vector.shape_cast %6 : vector<2xf32> to vector<2x1xf32>
    %8 = vector.broadcast %7 : vector<2x1xf32> to vector<2x128xf32>
    %9 = arith.subf %5, %8 : vector<2x128xf32>
    %10 = math.exp %9 : vector<2x128xf32>
    %cst_6 = arith.constant dense<0.000000e+00> : vector<2xf32>
    %11 = vector.multi_reduction <add>, %10, %cst_6 [1] : vector<2x128xf32> to vector<2xf32>
    %12 = vector.shape_cast %11 : vector<2xf32> to vector<2x1xf32>
    %13 = math.log %12 : vector<2x1xf32>
    %14 = vector.broadcast %13 : vector<2x1xf32> to vector<2x128xf32>
    %15 = arith.subf %9, %14 : vector<2x128xf32>
    %c0_7 = arith.constant 0 : index
    %c0_8 = arith.constant 0 : index
    %16 = vector.load %arg4[%c0_7, %c0_8] : memref<2x128xf32, #tpu.memory_space<vmem>>, vector<2x128xf32>
    tpu.vector_store %arg4[%c0_7, %c0_8], %15 {strides = array<i32>} : memref<2x128xf32, #tpu.memory_space<vmem>>, vector<2x128xf32>,
    return
  }
  func.func @transform_0(%arg0: i32) -> (i32, i32) {
    %c0_i32 = arith.constant 0 : i32
    %c0_i32_0 = arith.constant 0 : i32
    return %arg0, %c0_i32 : i32, i32
  }
  func.func @transform_1(%arg0: i32) -> (i32, i32) {
    %c0_i32 = arith.constant 0 : i32
    %c0_i32_0 = arith.constant 0 : i32
    %c0_i32_1 = arith.constant 0 : i32
    return %c0_i32, %c0_i32_0 : i32, i32
  }
  func.func @transform_2(%arg0: i32) -> (i32, i32) {
    %c0_i32 = arith.constant 0 : i32
    %c0_i32_0 = arith.constant 0 : i32
    %c0_i32_1 = arith.constant 0 : i32
    return %c0_i32, %c0_i32_0 : i32, i32
  }
  func.func @transform_3(%arg0: i32) -> (i32, i32) {
    %c0_i32 = arith.constant 0 : i32
    %c0_i32_0 = arith.constant 0 : i32
    return %arg0, %c0_i32 : i32, i32
  }
}

</mosaic_0001>

<llo_original>
// kernel: tpu_custom_call.1
$region0: #{tpu_custom_call.1}
  #allocation0 [shape = 'u32[]', space=smem, size = 0x4, offset = 0x4, fixed_abs, tag = 'smem constant byte address 0x4 - core index']
  #allocation1 [shape = 'u32[144,128]{1,0:T(1,128)}', space=vmem, size = 0x12000, scoped, tag = 'internal scratch']
  %s0 = inlined_call_operand.hbm [shape: bf16[2,2048], index: 0, kind: input, shape index: {}]
  %s1 = inlined_call_operand.hbm [shape: bf16[128,2048], index: 1, kind: input, shape index: {}]
  %s2 = inlined_call_operand.vmem [shape: f32[1,128], index: 2, kind: input, shape index: {}]
  %s3 = inlined_call_operand.hbm [shape: f32[2,128], index: 3, kind: output, shape index: {}]
  %s4 = sld [smem:[#allocation0]]
  $region30: #{tpu_custom_call.1} parent=0
    _
  %s6 = ssub.s32 1, %s4
  %s7 = scalar_select 0, %s6, %s4
  $region1: #{tpu_custom_call.1} parent=0
    #allocation2 [shape = 'u8[8192]{0}', space=vmem, size = 0x2000, scoped, tag = 'input window, operand 0, single buffered']
    #allocation3 [shape = 's32[1]{0}', space=sflag, size = 0x4, scoped, tag = 'scoped memory for tpu_custom_call.1']
    #allocation4 [shape = 's32[1]{0}', space=sflag, size = 0x4, scoped, tag = 'scoped memory for tpu_custom_call.1']
    #allocation5 [shape = 'u8[524288]{0}', space=vmem, size = 0x80000, scoped, tag = 'input window, operand 1, single buffered']
    #allocation6 [shape = 's32[1]{0}', space=sflag, size = 0x4, scoped, tag = 'scoped memory for tpu_custom_call.1']
    #allocation7 [shape = 'u8[1024]{0}', space=vmem, size = 0x400, scoped, tag = 'output window, operand 0, single buffered']
    %8 = vsyncpa [#allocation3], 0
    %9 = vsyncpa [#allocation6], 0
    %10 = vsyncpa [#allocation4], 0
    // Predicated region
    $region2: #{tpu_custom_call.1} parent=1 // pred_check
      _
    $region3: #{tpu_custom_call.1} parent=1 // pred_check_branch
      %12 = sbr.rel (0) target = $region5
    $region4: #{tpu_custom_call.1} parent=1 // pred_region
      %s14 = ssub.s32 256, 256
      %15 = vsyncadd [#allocation3], %s14
      %s17 = sshll.u32 [#allocation2], 4
      %s18 = int_to_ptr.vmem [resolvable:$true] %s17
      %20 = dma.hbm_to_vmem [thread:$0]  %s0, 256, %s18, [#allocation3]
    $region5: #{tpu_custom_call.1} parent=1 // pred_fallthru
      _
    // Predicated region
    $region6: #{tpu_custom_call.1} parent=1 // pred_check
      _
    $region7: #{tpu_custom_call.1} parent=1 // pred_check_branch
      %22 = sbr.rel (0) target = $region9
    $region8: #{tpu_custom_call.1} parent=1 // pred_region
      %s24 = ssub.s32 16384, 16384
      %25 = vsyncadd [#allocation6], %s24
      %s26 = sshll.u32 [#allocation5], 4
      %s27 = int_to_ptr.vmem [resolvable:$true] %s26
      %32 = dma.hbm_to_vmem [thread:$0]  %s1, 16384, %s27, [#allocation6], 1024, 1024, 64
    $region9: #{tpu_custom_call.1} parent=1 // pred_fallthru
      _
    // Predicated region
    $region10: #{tpu_custom_call.1} parent=1 // pred_check
      _
    $region11: #{tpu_custom_call.1} parent=1 // pred_check_branch
      %34 = sbr.rel (0) target = $region13
    $region12: #{tpu_custom_call.1} parent=1 // pred_region
      _
    $region13: #{tpu_custom_call.1} parent=1 // pred_fallthru
      _
    // Predicated region
    $region14: #{tpu_custom_call.1} parent=1 // pred_check
      _
    $region15: #{tpu_custom_call.1} parent=1 // pred_check_branch
      %36 = sbr.rel (0) target = $region17
    $region16: #{tpu_custom_call.1} parent=1 // pred_region
      %37 = dma.done [#allocation3], 256
    $region17: #{tpu_custom_call.1} parent=1 // pred_fallthru
      _
    // Predicated region
    $region18: #{tpu_custom_call.1} parent=1 // pred_check
      _
    $region19: #{tpu_custom_call.1} parent=1 // pred_check_branch
      %39 = sbr.rel (0) target = $region21
    $region20: #{tpu_custom_call.1} parent=1 // pred_region
      %40 = dma.done [#allocation6], 16384
    $region21: #{tpu_custom_call.1} parent=1 // pred_fallthru
      _
    %v42 = vld [vmem:[#allocation2] sm:$0xff]
    %v43 = vld [vmem:[#allocation2 + $0x8] sm:$0xff]
    %v44 = vld [vmem:[#allocation5] sm:$0xff]
    %v45 = vld [vmem:[#allocation5 + $0x8] sm:$0xff]
    %v46 = vld [vmem:[#allocation5 + $0x10] sm:$0xff]
    %v47 = vld [vmem:[#allocation5 + $0x18] sm:$0xff]
    %v48 = vld [vmem:[#allocation5 + $0x20] sm:$0xff]
    %v49 = vld [vmem:[#allocation5 + $0x28] sm:$0xff]
    %v50 = vld [vmem:[#allocation5 + $0x30] sm:$0xff]
    %v51 = vld [vmem:[#allocation5 + $0x38] sm:$0xff]
    %v52 = vld [vmem:[#allocation5 + $0x40] sm:$0xff]
    %v53 = vld [vmem:[#allocation5 + $0x48] sm:$0xff]
    %v54 = vld [vmem:[#allocation5 + $0x50] sm:$0xff]
    %v55 = vld [vmem:[#allocation5 + $0x58] sm:$0xff]
    %v56 = vld [vmem:[#allocation5 + $0x60] sm:$0xff]
    %v57 = vld [vmem:[#allocation5 + $0x68] sm:$0xff]
    %v58 = vld [vmem:[#allocation5 + $0x70] sm:$0xff]
    %v59 = vld [vmem:[#allocation5 + $0x78] sm:$0xff]
    %v60 = vld [vmem:[#allocation5 + $0x80] sm:$0xff]
    %v61 = vld [vmem:[#allocation5 + $0x88] sm:$0xff]
    %v62 = vld [vmem:[#allocation5 + $0x90] sm:$0xff]
    %v63 = vld [vmem:[#allocation5 + $0x98] sm:$0xff]
    %v64 = vld [vmem:[#allocation5 + $0xa0] sm:$0xff]
    %v65 = vld [vmem:[#allocation5 + $0xa8] sm:$0xff]
    %v66 = vld [vmem:[#allocation5 + $0xb0] sm:$0xff]
    %v67 = vld [vmem:[#allocation5 + $0xb8] sm:$0xff]
    %v68 = vld [vmem:[#allocation5 + $0xc0] sm:$0xff]
    %v69 = vld [vmem:[#allocation5 + $0xc8] sm:$0xff]
    %v70 = vld [vmem:[#allocation5 + $0xd0] sm:$0xff]
    %v71 = vld [vmem:[#allocation5 + $0xd8] sm:$0xff]
    %v72 = vld [vmem:[#allocation5 + $0xe0] sm:$0xff]
    %v73 = vld [vmem:[#allocation5 + $0xe8] sm:$0xff]
    %v74 = vld [vmem:[#allocation5 + $0xf0] sm:$0xff]
    %v75 = vld [vmem:[#allocation5 + $0xf8] sm:$0xff]
    %v76 = vld [vmem:[#allocation5 + $0x100] sm:$0xff]
    %v77 = vld [vmem:[#allocation5 + $0x108] sm:$0xff]
    %v78 = vld [vmem:[#allocation5 + $0x110] sm:$0xff]
    %v79 = vld [vmem:[#allocation5 + $0x118] sm:$0xff]
    %v80 = vld [vmem:[#allocation5 + $0x120] sm:$0xff]
    %v81 = vld [vmem:[#allocation5 + $0x128] sm:$0xff]
    %v82 = vld [vmem:[#allocation5 + $0x130] sm:$0xff]
    %v83 = vld [vmem:[#allocation5 + $0x138] sm:$0xff]
    %v84 = vld [vmem:[#allocation5 + $0x140] sm:$0xff]
    %v85 = vld [vmem:[#allocation5 + $0x148] sm:$0xff]
    %v86 = vld [vmem:[#allocation5 + $0x150] sm:$0xff]
    %v87 = vld [vmem:[#allocation5 + $0x158] sm:$0xff]
    %v88 = vld [vmem:[#allocation5 + $0x160] sm:$0xff]
    %v89 = vld [vmem:[#allocation5 + $0x168] sm:$0xff]
    %v90 = vld [vmem:[#allocation5 + $0x170] sm:$0xff]
    %v91 = vld [vmem:[#allocation5 + $0x178] sm:$0xff]
    %v92 = vld [vmem:[#allocation5 + $0x180] sm:$0xff]
    %v93 = vld [vmem:[#allocation5 + $0x188] sm:$0xff]
    %v94 = vld [vmem:[#allocation5 + $0x190] sm:$0xff]
    %v95 = vld [vmem:[#allocation5 + $0x198] sm:$0xff]
    %v96 = vld [vmem:[#allocation5 + $0x1a0] sm:$0xff]
    %v97 = vld [vmem:[#allocation5 + $0x1a8] sm:$0xff]
    %v98 = vld [vmem:[#allocation5 + $0x1b0] sm:$0xff]
    %v99 = vld [vmem:[#allocation5 + $0x1b8] sm:$0xff]
    %v100 = vld [vmem:[#allocation5 + $0x1c0] sm:$0xff]
    %v101 = vld [vmem:[#allocation5 + $0x1c8] sm:$0xff]
    %v102 = vld [vmem:[#allocation5 + $0x1d0] sm:$0xff]
    %v103 = vld [vmem:[#allocation5 + $0x1d8] sm:$0xff]
    %v104 = vld [vmem:[#allocation5 + $0x1e0] sm:$0xff]
    %v105 = vld [vmem:[#allocation5 + $0x1e8] sm:$0xff]
    %v106 = vld [vmem:[#allocation5 + $0x1f0] sm:$0xff]
    %v107 = vld [vmem:[#allocation5 + $0x1f8] sm:$0xff]
    %v108 = vld [vmem:[#allocation5 + $0x200] sm:$0xff]
    %v109 = vld [vmem:[#allocation5 + $0x208] sm:$0xff]
    %v110 = vld [vmem:[#allocation5 + $0x210] sm:$0xff]
    %v111 = vld [vmem:[#allocation5 + $0x218] sm:$0xff]
    %v112 = vld [vmem:[#allocation5 + $0x220] sm:$0xff]
    %v113 = vld [vmem:[#allocation5 + $0x228] sm:$0xff]
    %v114 = vld [vmem:[#allocation5 + $0x230] sm:$0xff]
    %v115 = vld [vmem:[#allocation5 + $0x238] sm:$0xff]
    %v116 = vld [vmem:[#allocation5 + $0x240] sm:$0xff]
    %v117 = vld [vmem:[#allocation5 + $0x248] sm:$0xff]
    %v118 = vld [vmem:[#allocation5 + $0x250] sm:$0xff]
    %v119 = vld [vmem:[#allocation5 + $0x258] sm:$0xff]
    %v120 = vld [vmem:[#allocation5 + $0x260] sm:$0xff]
    %v121 = vld [vmem:[#allocation5 + $0x268] sm:$0xff]
    %v122 = vld [vmem:[#allocation5 + $0x270] sm:$0xff]
    %v123 = vld [vmem:[#allocation5 + $0x278] sm:$0xff]
    %v124 = vld [vmem:[#allocation5 + $0x280] sm:$0xff]
    %v125 = vld [vmem:[#allocation5 + $0x288] sm:$0xff]
    %v126 = vld [vmem:[#allocation5 + $0x290] sm:$0xff]
    %v127 = vld [vmem:[#allocation5 + $0x298] sm:$0xff]
    %v128 = vld [vmem:[#allocation5 + $0x2a0] sm:$0xff]
    %v129 = vld [vmem:[#allocation5 + $0x2a8] sm:$0xff]
    %v130 = vld [vmem:[#allocation5 + $0x2b0] sm:$0xff]
    %v131 = vld [vmem:[#allocation5 + $0x2b8] sm:$0xff]
    %v132 = vld [vmem:[#allocation5 + $0x2c0] sm:$0xff]
    %v133 = vld [vmem:[#allocation5 + $0x2c8] sm:$0xff]
    %v134 = vld [vmem:[#allocation5 + $0x2d0] sm:$0xff]
    %v135 = vld [vmem:[#allocation5 + $0x2d8] sm:$0xff]
    %v136 = vld [vmem:[#allocation5 + $0x2e0] sm:$0xff]
    %v137 = vld [vmem:[#allocation5 + $0x2e8] sm:$0xff]
    %v138 = vld [vmem:[#allocation5 + $0x2f0] sm:$0xff]
    %v139 = vld [vmem:[#allocation5 + $0x2f8] sm:$0xff]
    %v140 = vld [vmem:[#allocation5 + $0x300] sm:$0xff]
    %v141 = vld [vmem:[#allocation5 + $0x308] sm:$0xff]
    %v142 = vld [vmem:[#allocation5 + $0x310] sm:$0xff]
    %v143 = vld [vmem:[#allocation5 + $0x318] sm:$0xff]
    %v144 = vld [vmem:[#allocation5 + $0x320] sm:$0xff]
    %v145 = vld [vmem:[#allocation5 + $0x328] sm:$0xff]
    %v146 = vld [vmem:[#allocation5 + $0x330] sm:$0xff]
    %v147 = vld [vmem:[#allocation5 + $0x338] sm:$0xff]
    %v148 = vld [vmem:[#allocation5 + $0x340] sm:$0xff]
    %v149 = vld [vmem:[#allocation5 + $0x348] sm:$0xff]
    %v150 = vld [vmem:[#allocation5 + $0x350] sm:$0xff]
    %v151 = vld [vmem:[#allocation5 + $0x358] sm:$0xff]
    %v152 = vld [vmem:[#allocation5 + $0x360] sm:$0xff]
    %v153 = vld [vmem:[#allocation5 + $0x368] sm:$0xff]
    %v154 = vld [vmem:[#allocation5 + $0x370] sm:$0xff]
    %v155 = vld [vmem:[#allocation5 + $0x378] sm:$0xff]
    %v156 = vld [vmem:[#allocation5 + $0x380] sm:$0xff]
    %v157 = vld [vmem:[#allocation5 + $0x388] sm:$0xff]
    %v158 = vld [vmem:[#allocation5 + $0x390] sm:$0xff]
    %v159 = vld [vmem:[#allocation5 + $0x398] sm:$0xff]
    %v160 = vld [vmem:[#allocation5 + $0x3a0] sm:$0xff]
    %v161 = vld [vmem:[#allocation5 + $0x3a8] sm:$0xff]
    %v162 = vld [vmem:[#allocation5 + $0x3b0] sm:$0xff]
    %v163 = vld [vmem:[#allocation5 + $0x3b8] sm:$0xff]
    %v164 = vld [vmem:[#allocation5 + $0x3c0] sm:$0xff]
    %v165 = vld [vmem:[#allocation5 + $0x3c8] sm:$0xff]
    %v166 = vld [vmem:[#allocation5 + $0x3d0] sm:$0xff]
    %v167 = vld [vmem:[#allocation5 + $0x3d8] sm:$0xff]
    %v168 = vld [vmem:[#allocation5 + $0x3e0] sm:$0xff]
    %v169 = vld [vmem:[#allocation5 + $0x3e8] sm:$0xff]
    %v170 = vld [vmem:[#allocation5 + $0x3f0] sm:$0xff]
    %v171 = vld [vmem:[#allocation5 + $0x3f8] sm:$0xff]
    %v172 = vld [vmem:[%s2] sm:$0x1]
    %v174 = vlaneseq
    %v175 = vshrl.u32 %v174, 7
    %v176 = vsub.s32 0, %v175
    %v177 = vrot.slane %v172, %v176
    %v181 = vcombine.high %v42, %v42
    %v183 = vunpack.c.l.s4 1966171168
    %v184 = vunpack.c.0.s8 %v183
    %v185 = vlaneseq
    %v186 = vshrl.u32 %v185, 7
    %v187 = vsub.s32 %v184, %v186
    %v188 = vrot.slane %v42, %v187
    %v190 = vunpack.c.l.s4 1966171168
    %v191 = vunpack.c.0.s8 %v190
    %v192 = vlaneseq
    %v193 = vshrl.u32 %v192, 7
    %v194 = vsub.s32 %v191, %v193
    %v195 = vrot.slane %v181, %v194
    %v196 = vcombine.high %v188, %v188
    %v197 = vcombine.high %v195, %v195
    %v199 = vunpack.c.l.s4 1966171168
    %v200 = vunpack.c.0.s8 %v199
    %v201 = vlaneseq
    %v202 = vshrl.u32 %v201, 7
    %v203 = vsub.s32 %v200, %v202
    %v204 = vrot.slane %v188, %v203
    %v206 = vunpack.c.l.s4 1966171168
    %v207 = vunpack.c.0.s8 %v206
    %v208 = vlaneseq
    %v209 = vshrl.u32 %v208, 7
    %v210 = vsub.s32 %v207, %v209
    %v211 = vrot.slane %v195, %v210
    %v213 = vunpack.c.l.s4 1966171168
    %v214 = vunpack.c.0.s8 %v213
    %v215 = vlaneseq
    %v216 = vshrl.u32 %v215, 7
    %v217 = vsub.s32 %v214, %v216
    %v218 = vrot.slane %v196, %v217
    %v220 = vunpack.c.l.s4 1966171168
    %v221 = vunpack.c.0.s8 %v220
    %v222 = vlaneseq
    %v223 = vshrl.u32 %v222, 7
    %v224 = vsub.s32 %v221, %v223
    %v225 = vrot.slane %v197, %v224
    %v226 = vcombine.high %v204, %v204
    %v227 = vcombine.high %v211, %v211
    %v228 = vcombine.high %v218, %v218
    %v229 = vcombine.high %v225, %v225
    %v230 = vcombine.high %v43, %v43
    %v232 = vunpack.c.l.s4 1966171168
    %v233 = vunpack.c.0.s8 %v232
    %v234 = vlaneseq
    %v235 = vshrl.u32 %v234, 7
    %v236 = vsub.s32 %v233, %v235
    %v237 = vrot.slane %v43, %v236
    %v239 = vunpack.c.l.s4 1966171168
    %v240 = vunpack.c.0.s8 %v239
    %v241 = vlaneseq
    %v242 = vshrl.u32 %v241, 7
    %v243 = vsub.s32 %v240, %v242
    %v244 = vrot.slane %v230, %v243
    %v245 = vcombine.high %v237, %v237
    %v246 = vcombine.high %v244, %v244
    %v248 = vunpack.c.l.s4 1966171168
    %v249 = vunpack.c.0.s8 %v248
    %v250 = vlaneseq
    %v251 = vshrl.u32 %v250, 7
    %v252 = vsub.s32 %v249, %v251
    %v253 = vrot.slane %v237, %v252
    %v255 = vunpack.c.l.s4 1966171168
    %v256 = vunpack.c.0.s8 %v255
    %v257 = vlaneseq
    %v258 = vshrl.u32 %v257, 7
    %v259 = vsub.s32 %v256, %v258
    %v260 = vrot.slane %v244, %v259
    %v262 = vunpack.c.l.s4 1966171168
    %v263 = vunpack.c.0.s8 %v262
    %v264 = vlaneseq
    %v265 = vshrl.u32 %v264, 7
    %v266 = vsub.s32 %v263, %v265
    %v267 = vrot.slane %v245, %v266
    %v269 = vunpack.c.l.s4 1966171168
    %v270 = vunpack.c.0.s8 %v269
    %v271 = vlaneseq
    %v272 = vshrl.u32 %v271, 7
    %v273 = vsub.s32 %v270, %v272
    %v274 = vrot.slane %v246, %v273
    %v275 = vcombine.high %v253, %v253
    %v276 = vcombine.high %v260, %v260
    %v277 = vcombine.high %v267, %v267
    %v278 = vcombine.high %v274, %v274
    %v423 = vunpack.c.l.b16 %v44
    %v424 = vunpack.c.h.b16 %v44
    %v425 = vunpack.c.l.b16 %v45
    %v426 = vunpack.c.h.b16 %v45
    %v427 = vunpack.c.l.b16 %v46
    %v428 = vunpack.c.h.b16 %v46
    %v429 = vunpack.c.l.b16 %v47
    %v430 = vunpack.c.h.b16 %v47
    %v431 = vunpack.c.l.b16 %v48
    %v432 = vunpack.c.h.b16 %v48
    %v433 = vunpack.c.l.b16 %v49
    %v434 = vunpack.c.h.b16 %v49
    %v435 = vunpack.c.l.b16 %v50
    %v436 = vunpack.c.h.b16 %v50
    %v437 = vunpack.c.l.b16 %v51
    %v438 = vunpack.c.h.b16 %v51
    %v439 = vunpack.c.l.b16 %v52
    %v440 = vunpack.c.h.b16 %v52
    %v441 = vunpack.c.l.b16 %v53
    %v442 = vunpack.c.h.b16 %v53
    %v443 = vunpack.c.l.b16 %v54
    %v444 = vunpack.c.h.b16 %v54
    %v445 = vunpack.c.l.b16 %v55
    %v446 = vunpack.c.h.b16 %v55
    %v447 = vunpack.c.l.b16 %v56
    %v448 = vunpack.c.h.b16 %v56
    %v449 = vunpack.c.l.b16 %v57
    %v450 = vunpack.c.h.b16 %v57
    %v451 = vunpack.c.l.b16 %v58
    %v452 = vunpack.c.h.b16 %v58
    %v453 = vunpack.c.l.b16 %v59
    %v454 = vunpack.c.h.b16 %v59
    %v455 = vunpack.c.l.b16 %v60
    %v456 = vunpack.c.h.b16 %v60
    %v457 = vunpack.c.l.b16 %v61
    %v458 = vunpack.c.h.b16 %v61
    %v459 = vunpack.c.l.b16 %v62
    %v460 = vunpack.c.h.b16 %v62
    %v461 = vunpack.c.l.b16 %v63
    %v462 = vunpack.c.h.b16 %v63
    %v463 = vunpack.c.l.b16 %v64
    %v464 = vunpack.c.h.b16 %v64
    %v465 = vunpack.c.l.b16 %v65
    %v466 = vunpack.c.h.b16 %v65
    %v467 = vunpack.c.l.b16 %v66
    %v468 = vunpack.c.h.b16 %v66
    %v469 = vunpack.c.l.b16 %v67
    %v470 = vunpack.c.h.b16 %v67
    %v471 = vunpack.c.l.b16 %v68
    %v472 = vunpack.c.h.b16 %v68
    %v473 = vunpack.c.l.b16 %v69
    %v474 = vunpack.c.h.b16 %v69
    %v475 = vunpack.c.l.b16 %v70
    %v476 = vunpack.c.h.b16 %v70
    %v477 = vunpack.c.l.b16 %v71
    %v478 = vunpack.c.h.b16 %v71
    %v479 = vunpack.c.l.b16 %v72
    %v480 = vunpack.c.h.b16 %v72
    %v481 = vunpack.c.l.b16 %v73
    %v482 = vunpack.c.h.b16 %v73
    %v483 = vunpack.c.l.b16 %v74
    %v484 = vunpack.c.h.b16 %v74
    %v485 = vunpack.c.l.b16 %v75
    %v486 = vunpack.c.h.b16 %v75
    %v487 = vunpack.c.l.b16 %v76
    %v488 = vunpack.c.h.b16 %v76
    %v489 = vunpack.c.l.b16 %v77
    %v490 = vunpack.c.h.b16 %v77
    %v491 = vunpack.c.l.b16 %v78
    %v492 = vunpack.c.h.b16 %v78
    %v493 = vunpack.c.l.b16 %v79
    %v494 = vunpack.c.h.b16 %v79
    %v495 = vunpack.c.l.b16 %v80
    %v496 = vunpack.c.h.b16 %v80
    %v497 = vunpack.c.l.b16 %v81
    %v498 = vunpack.c.h.b16 %v81
    %v499 = vunpack.c.l.b16 %v82
    %v500 = vunpack.c.h.b16 %v82
    %v501 = vunpack.c.l.b16 %v83
    %v502 = vunpack.c.h.b16 %v83
    %v503 = vunpack.c.l.b16 %v84
    %v504 = vunpack.c.h.b16 %v84
    %v505 = vunpack.c.l.b16 %v85
    %v506 = vunpack.c.h.b16 %v85
    %v507 = vunpack.c.l.b16 %v86
    %v508 = vunpack.c.h.b16 %v86
    %v509 = vunpack.c.l.b16 %v87
    %v510 = vunpack.c.h.b16 %v87
    %v511 = vunpack.c.l.b16 %v88
    %v512 = vunpack.c.h.b16 %v88
    %v513 = vunpack.c.l.b16 %v89
    %v514 = vunpack.c.h.b16 %v89
    %v515 = vunpack.c.l.b16 %v90
    %v516 = vunpack.c.h.b16 %v90
    %v517 = vunpack.c.l.b16 %v91
    %v518 = vunpack.c.h.b16 %v91
    %v519 = vunpack.c.l.b16 %v92
    %v520 = vunpack.c.h.b16 %v92
    %v521 = vunpack.c.l.b16 %v93
    %v522 = vunpack.c.h.b16 %v93
    %v523 = vunpack.c.l.b16 %v94
    %v524 = vunpack.c.h.b16 %v94
    %v525 = vunpack.c.l.b16 %v95
    %v526 = vunpack.c.h.b16 %v95
    %v527 = vunpack.c.l.b16 %v96
    %v528 = vunpack.c.h.b16 %v96
    %v529 = vunpack.c.l.b16 %v97
    %v530 = vunpack.c.h.b16 %v97
    %v531 = vunpack.c.l.b16 %v98
    %v532 = vunpack.c.h.b16 %v98
    %v533 = vunpack.c.l.b16 %v99
    %v534 = vunpack.c.h.b16 %v99
    %v535 = vunpack.c.l.b16 %v100
    %v536 = vunpack.c.h.b16 %v100
    %v537 = vunpack.c.l.b16 %v101
    %v538 = vunpack.c.h.b16 %v101
    %v539 = vunpack.c.l.b16 %v102
    %v540 = vunpack.c.h.b16 %v102
    %v541 = vunpack.c.l.b16 %v103
    %v542 = vunpack.c.h.b16 %v103
    %v543 = vunpack.c.l.b16 %v104
    %v544 = vunpack.c.h.b16 %v104
    %v545 = vunpack.c.l.b16 %v105
    %v546 = vunpack.c.h.b16 %v105
    %v547 = vunpack.c.l.b16 %v106
    %v548 = vunpack.c.h.b16 %v106
    %v549 = vunpack.c.l.b16 %v107
    %v550 = vunpack.c.h.b16 %v107
    %v551 = vunpack.c.l.b16 %v108
    %v552 = vunpack.c.h.b16 %v108
    %v553 = vunpack.c.l.b16 %v109
    %v554 = vunpack.c.h.b16 %v109
    %v555 = vunpack.c.l.b16 %v110
    %v556 = vunpack.c.h.b16 %v110
    %v557 = vunpack.c.l.b16 %v111
    %v558 = vunpack.c.h.b16 %v111
    %v559 = vunpack.c.l.b16 %v112
    %v560 = vunpack.c.h.b16 %v112
    %v561 = vunpack.c.l.b16 %v113
    %v562 = vunpack.c.h.b16 %v113
    %v563 = vunpack.c.l.b16 %v114
    %v564 = vunpack.c.h.b16 %v114
    %v565 = vunpack.c.l.b16 %v115
    %v566 = vunpack.c.h.b16 %v115
    %v567 = vunpack.c.l.b16 %v116
    %v568 = vunpack.c.h.b16 %v116
    %v569 = vunpack.c.l.b16 %v117
    %v570 = vunpack.c.h.b16 %v117
    %v571 = vunpack.c.l.b16 %v118
    %v572 = vunpack.c.h.b16 %v118
    %v573 = vunpack.c.l.b16 %v119
    %v574 = vunpack.c.h.b16 %v119
    %v575 = vunpack.c.l.b16 %v120
    %v576 = vunpack.c.h.b16 %v120
    %v577 = vunpack.c.l.b16 %v121
    %v578 = vunpack.c.h.b16 %v121
    %v579 = vunpack.c.l.b16 %v122
    %v580 = vunpack.c.h.b16 %v122
    %v581 = vunpack.c.l.b16 %v123
    %v582 = vunpack.c.h.b16 %v123
    %v583 = vunpack.c.l.b16 %v124
    %v584 = vunpack.c.h.b16 %v124
    %v585 = vunpack.c.l.b16 %v125
    %v586 = vunpack.c.h.b16 %v125
    %v587 = vunpack.c.l.b16 %v126
    %v588 = vunpack.c.h.b16 %v126
    %v589 = vunpack.c.l.b16 %v127
    %v590 = vunpack.c.h.b16 %v127
    %v591 = vunpack.c.l.b16 %v128
    %v592 = vunpack.c.h.b16 %v128
    %v593 = vunpack.c.l.b16 %v129
    %v594 = vunpack.c.h.b16 %v129
    %v595 = vunpack.c.l.b16 %v130
    %v596 = vunpack.c.h.b16 %v130
    %v597 = vunpack.c.l.b16 %v131
    %v598 = vunpack.c.h.b16 %v131
    %v599 = vunpack.c.l.b16 %v132
    %v600 = vunpack.c.h.b16 %v132
    %v601 = vunpack.c.l.b16 %v133
    %v602 = vunpack.c.h.b16 %v133
    %v603 = vunpack.c.l.b16 %v134
    %v604 = vunpack.c.h.b16 %v134
    %v605 = vunpack.c.l.b16 %v135
    %v606 = vunpack.c.h.b16 %v135
    %v607 = vunpack.c.l.b16 %v136
    %v608 = vunpack.c.h.b16 %v136
    %v609 = vunpack.c.l.b16 %v137
    %v610 = vunpack.c.h.b16 %v137
    %v611 = vunpack.c.l.b16 %v138
    %v612 = vunpack.c.h.b16 %v138
    %v613 = vunpack.c.l.b16 %v139
    %v614 = vunpack.c.h.b16 %v139
    %v615 = vunpack.c.l.b16 %v140
    %v616 = vunpack.c.h.b16 %v140
    %v617 = vunpack.c.l.b16 %v141
    %v618 = vunpack.c.h.b16 %v141
    %v619 = vunpack.c.l.b16 %v142
    %v620 = vunpack.c.h.b16 %v142
    %v621 = vunpack.c.l.b16 %v143
    %v622 = vunpack.c.h.b16 %v143
    %v623 = vunpack.c.l.b16 %v144
    %v624 = vunpack.c.h.b16 %v144
    %v625 = vunpack.c.l.b16 %v145
    %v626 = vunpack.c.h.b16 %v145
    %v627 = vunpack.c.l.b16 %v146
    %v628 = vunpack.c.h.b16 %v146
    %v629 = vunpack.c.l.b16 %v147
    %v630 = vunpack.c.h.b16 %v147
    %v631 = vunpack.c.l.b16 %v148
    %v632 = vunpack.c.h.b16 %v148
    %v633 = vunpack.c.l.b16 %v149
    %v634 = vunpack.c.h.b16 %v149
    %v635 = vunpack.c.l.b16 %v150
    %v636 = vunpack.c.h.b16 %v150
    %v637 = vunpack.c.l.b16 %v151
    %v638 = vunpack.c.h.b16 %v151
    %v639 = vunpack.c.l.b16 %v152
    %v640 = vunpack.c.h.b16 %v152
    %v641 = vunpack.c.l.b16 %v153
    %v642 = vunpack.c.h.b16 %v153
    %v643 = vunpack.c.l.b16 %v154
    %v644 = vunpack.c.h.b16 %v154
    %v645 = vunpack.c.l.b16 %v155
    %v646 = vunpack.c.h.b16 %v155
    %v647 = vunpack.c.l.b16 %v156
    %v648 = vunpack.c.h.b16 %v156
    %v649 = vunpack.c.l.b16 %v157
    %v650 = vunpack.c.h.b16 %v157
    %v651 = vunpack.c.l.b16 %v158
    %v652 = vunpack.c.h.b16 %v158
    %v653 = vunpack.c.l.b16 %v159
    %v654 = vunpack.c.h.b16 %v159
    %v655 = vunpack.c.l.b16 %v160
    %v656 = vunpack.c.h.b16 %v160
    %v657 = vunpack.c.l.b16 %v161
    %v658 = vunpack.c.h.b16 %v161
    %v659 = vunpack.c.l.b16 %v162
    %v660 = vunpack.c.h.b16 %v162
    %v661 = vunpack.c.l.b16 %v163
    %v662 = vunpack.c.h.b16 %v163
    %v663 = vunpack.c.l.b16 %v164
    %v664 = vunpack.c.h.b16 %v164
    %v665 = vunpack.c.l.b16 %v165
    %v666 = vunpack.c.h.b16 %v165
    %v667 = vunpack.c.l.b16 %v166
    %v668 = vunpack.c.h.b16 %v166
    %v669 = vunpack.c.l.b16 %v167
    %v670 = vunpack.c.h.b16 %v167
    %v671 = vunpack.c.l.b16 %v168
    %v672 = vunpack.c.h.b16 %v168
    %v673 = vunpack.c.l.b16 %v169
    %v674 = vunpack.c.h.b16 %v169
    %v675 = vunpack.c.l.b16 %v170
    %v676 = vunpack.c.h.b16 %v170
    %v677 = vunpack.c.l.b16 %v171
    %v678 = vunpack.c.h.b16 %v171
    %v679 = vpack.c.b16 %v439, %v423
    %v680 = vpack.c.b16 %v440, %v424
    %v681 = vpack.c.b16 %v441, %v425
    %v682 = vpack.c.b16 %v442, %v426
    %v683 = vpack.c.b16 %v443, %v427
    %v684 = vpack.c.b16 %v444, %v428
    %v685 = vpack.c.b16 %v445, %v429
    %v686 = vpack.c.b16 %v446, %v430
    %v687 = vpack.c.b16 %v447, %v431
    %v688 = vpack.c.b16 %v448, %v432
    %v689 = vpack.c.b16 %v449, %v433
    %v690 = vpack.c.b16 %v450, %v434
    %v691 = vpack.c.b16 %v451, %v435
    %v692 = vpack.c.b16 %v452, %v436
    %v693 = vpack.c.b16 %v453, %v437
    %v694 = vpack.c.b16 %v454, %v438
    %v695 = vpack.c.b16 %v471, %v455
    %v696 = vpack.c.b16 %v472, %v456
    %v697 = vpack.c.b16 %v473, %v457
    %v698 = vpack.c.b16 %v474, %v458
    %v699 = vpack.c.b16 %v475, %v459
    %v700 = vpack.c.b16 %v476, %v460
    %v701 = vpack.c.b16 %v477, %v461
    %v702 = vpack.c.b16 %v478, %v462
    %v703 = vpack.c.b16 %v479, %v463
    %v704 = vpack.c.b16 %v480, %v464
    %v705 = vpack.c.b16 %v481, %v465
    %v706 = vpack.c.b16 %v482, %v466
    %v707 = vpack.c.b16 %v483, %v467
    %v708 = vpack.c.b16 %v484, %v468
    %v709 = vpack.c.b16 %v485, %v469
    %v710 = vpack.c.b16 %v486, %v470
    %v711 = vpack.c.b16 %v503, %v487
    %v712 = vpack.c.b16 %v504, %v488
    %v713 = vpack.c.b16 %v505, %v489
    %v714 = vpack.c.b16 %v506, %v490
    %v715 = vpack.c.b16 %v507, %v491
    %v716 = vpack.c.b16 %v508, %v492
    %v717 = vpack.c.b16 %v509, %v493
    %v718 = vpack.c.b16 %v510, %v494
    %v719 = vpack.c.b16 %v511, %v495
    %v720 = vpack.c.b16 %v512, %v496
    %v721 = vpack.c.b16 %v513, %v497
    %v722 = vpack.c.b16 %v514, %v498
    %v723 = vpack.c.b16 %v515, %v499
    %v724 = vpack.c.b16 %v516, %v500
    %v725 = vpack.c.b16 %v517, %v501
    %v726 = vpack.c.b16 %v518, %v502
    %v727 = vpack.c.b16 %v535, %v519
    %v728 = vpack.c.b16 %v536, %v520
    %v729 = vpack.c.b16 %v537, %v521
    %v730 = vpack.c.b16 %v538, %v522
    %v731 = vpack.c.b16 %v539, %v523
    %v732 = vpack.c.b16 %v540, %v524
    %v733 = vpack.c.b16 %v541, %v525
    %v734 = vpack.c.b16 %v542, %v526
    %v735 = vpack.c.b16 %v543, %v527
    %v736 = vpack.c.b16 %v544, %v528
    %v737 = vpack.c.b16 %v545, %v529
    %v738 = vpack.c.b16 %v546, %v530
    %v739 = vpack.c.b16 %v547, %v531
    %v740 = vpack.c.b16 %v548, %v532
    %v741 = vpack.c.b16 %v549, %v533
    %v742 = vpack.c.b16 %v550, %v534
    %v743 = vpack.c.b16 %v567, %v551
    %v744 = vpack.c.b16 %v568, %v552
    %v745 = vpack.c.b16 %v569, %v553
    %v746 = vpack.c.b16 %v570, %v554
    %v747 = vpack.c.b16 %v571, %v555
    %v748 = vpack.c.b16 %v572, %v556
    %v749 = vpack.c.b16 %v573, %v557
    %v750 = vpack.c.b16 %v574, %v558
    %v751 = vpack.c.b16 %v575, %v559
    %v752 = vpack.c.b16 %v576, %v560
    %v753 = vpack.c.b16 %v577, %v561
    %v754 = vpack.c.b16 %v578, %v562
    %v755 = vpack.c.b16 %v579, %v563
    %v756 = vpack.c.b16 %v580, %v564
    %v757 = vpack.c.b16 %v581, %v565
    %v758 = vpack.c.b16 %v582, %v566
    %v759 = vpack.c.b16 %v599, %v583
    %v760 = vpack.c.b16 %v600, %v584
    %v761 = vpack.c.b16 %v601, %v585
    %v762 = vpack.c.b16 %v602, %v586
    %v763 = vpack.c.b16 %v603, %v587
    %v764 = vpack.c.b16 %v604, %v588
    %v765 = vpack.c.b16 %v605, %v589
    %v766 = vpack.c.b16 %v606, %v590
    %v767 = vpack.c.b16 %v607, %v591
    %v768 = vpack.c.b16 %v608, %v592
    %v769 = vpack.c.b16 %v609, %v593
    %v770 = vpack.c.b16 %v610, %v594
    %v771 = vpack.c.b16 %v611, %v595
    %v772 = vpack.c.b16 %v612, %v596
    %v773 = vpack.c.b16 %v613, %v597
    %v774 = vpack.c.b16 %v614, %v598
    %v775 = vpack.c.b16 %v631, %v615
    %v776 = vpack.c.b16 %v632, %v616
    %v777 = vpack.c.b16 %v633, %v617
    %v778 = vpack.c.b16 %v634, %v618
    %v779 = vpack.c.b16 %v635, %v619
    %v780 = vpack.c.b16 %v636, %v620
    %v781 = vpack.c.b16 %v637, %v621
    %v782 = vpack.c.b16 %v638, %v622
    %v783 = vpack.c.b16 %v639, %v623
    %v784 = vpack.c.b16 %v640, %v624
    %v785 = vpack.c.b16 %v641, %v625
    %v786 = vpack.c.b16 %v642, %v626
    %v787 = vpack.c.b16 %v643, %v627
    %v788 = vpack.c.b16 %v644, %v628
    %v789 = vpack.c.b16 %v645, %v629
    %v790 = vpack.c.b16 %v646, %v630
    %v791 = vpack.c.b16 %v663, %v647
    %v792 = vpack.c.b16 %v664, %v648
    %v793 = vpack.c.b16 %v665, %v649
    %v794 = vpack.c.b16 %v666, %v650
    %v795 = vpack.c.b16 %v667, %v651
    %v796 = vpack.c.b16 %v668, %v652
    %v797 = vpack.c.b16 %v669, %v653
    %v798 = vpack.c.b16 %v670, %v654
    %v799 = vpack.c.b16 %v671, %v655
    %v800 = vpack.c.b16 %v672, %v656
    %v801 = vpack.c.b16 %v673, %v657
    %v802 = vpack.c.b16 %v674, %v658
    %v803 = vpack.c.b16 %v675, %v659
    %v804 = vpack.c.b16 %v676, %v660
    %v805 = vpack.c.b16 %v677, %v661
    %v806 = vpack.c.b16 %v678, %v662
    %935 = vmatprep.subr.bf16.mxu0 %v680
    %936 = vmatpush1.bf16.xpose.msra.mxu0 %v679
    %937 = vmatprep.subr.bf16.mxu0 %v696
    %938 = vmatpush1.bf16.xpose.msra.mxu0 %v695
    %939 = vmatprep.subr.bf16.mxu0 %v712
    %940 = vmatpush1.bf16.xpose.msra.mxu0 %v711
    %941 = vmatprep.subr.bf16.mxu0 %v728
    %942 = vmatpush1.bf16.xpose.msra.mxu0 %v727
    %943 = vmatprep.subr.bf16.mxu0 %v744
    %944 = vmatpush1.bf16.xpose.msra.mxu0 %v743
    %945 = vmatprep.subr.bf16.mxu0 %v760
    %946 = vmatpush1.bf16.xpose.msra.mxu0 %v759
    %947 = vmatprep.subr.bf16.mxu0 %v776
    %948 = vmatpush1.bf16.xpose.msra.mxu0 %v775
    %949 = vmatprep.subr.bf16.mxu0 %v792
    %950 = vmatpush1.bf16.xpose.msra.mxu0 %v791
    %951 = vmatprep.subr.bf16.mxu0 0
    %952 = vmatpush1.bf16.xpose.msra.mxu0 0
    %953 = vmatprep.subr.bf16.mxu0 0
    %954 = vmatpush1.bf16.xpose.msra.mxu0 0
    %955 = vmatprep.subr.bf16.mxu0 0
    %956 = vmatpush1.bf16.xpose.msra.mxu0 0
    %957 = vmatprep.subr.bf16.mxu0 0
    %958 = vmatpush1.bf16.xpose.msra.mxu0 0
    %959 = vmatprep.subr.bf16.mxu0 0
    %960 = vmatpush1.bf16.xpose.msra.mxu0 0
    %961 = vmatprep.subr.bf16.mxu0 0
    %962 = vmatpush1.bf16.xpose.msra.mxu0 0
    %963 = vmatprep.subr.bf16.mxu0 0
    %964 = vmatpush1.bf16.xpose.msra.mxu0 0
    %965 = vmatprep.subr.bf16.mxu0 0
    %966 = vmatpush1.bf16.xpose.msra.mxu0 0
    %967 = vmatprep.mubr.bf16.mxu0 %v218
    %968 = vmatmul.mubr.bf16.gmra.mrb[0].mxu0 %v204
    %v969 = vpop.f32.mrb[0].mxu0
    %v970 = vadd.f32 %v177, %v969
    %v971 = vpop.f32.mrb[0].mxu0
    %v972 = vpop.f32.mrb[0].mxu0
    %v973 = vpop.f32.mrb[0].mxu0
    %974 = vdwg.mxu0
    %975 = vmatprep.subr.bf16.mxu0 %v682
    %976 = vmatpush1.bf16.xpose.msra.mxu0 %v681
    %977 = vmatprep.subr.bf16.mxu0 %v698
    %978 = vmatpush1.bf16.xpose.msra.mxu0 %v697
    %979 = vmatprep.subr.bf16.mxu0 %v714
    %980 = vmatpush1.bf16.xpose.msra.mxu0 %v713
    %981 = vmatprep.subr.bf16.mxu0 %v730
    %982 = vmatpush1.bf16.xpose.msra.mxu0 %v729
    %983 = vmatprep.subr.bf16.mxu0 %v746
    %984 = vmatpush1.bf16.xpose.msra.mxu0 %v745
    %985 = vmatprep.subr.bf16.mxu0 %v762
    %986 = vmatpush1.bf16.xpose.msra.mxu0 %v761
    %987 = vmatprep.subr.bf16.mxu0 %v778
    %988 = vmatpush1.bf16.xpose.msra.mxu0 %v777
    %989 = vmatprep.subr.bf16.mxu0 %v794
    %990 = vmatpush1.bf16.xpose.msra.mxu0 %v793
    %991 = vmatprep.subr.bf16.mxu0 0
    %992 = vmatpush1.bf16.xpose.msra.mxu0 0
    %993 = vmatprep.subr.bf16.mxu0 0
    %994 = vmatpush1.bf16.xpose.msra.mxu0 0
    %995 = vmatprep.subr.bf16.mxu0 0
    %996 = vmatpush1.bf16.xpose.msra.mxu0 0
    %997 = vmatprep.subr.bf16.mxu0 0
    %998 = vmatpush1.bf16.xpose.msra.mxu0 0
    %999 = vmatprep.subr.bf16.mxu0 0
    %1000 = vmatpush1.bf16.xpose.msra.mxu0 0
    %1001 = vmatprep.subr.bf16.mxu0 0
    %1002 = vmatpush1.bf16.xpose.msra.mxu0 0
    %1003 = vmatprep.subr.bf16.mxu0 0
    %1004 = vmatpush1.bf16.xpose.msra.mxu0 0
    %1005 = vmatprep.subr.bf16.mxu0 0
    %1006 = vmatpush1.bf16.xpose.msra.mxu0 0
    %1007 = vmatprep.mubr.bf16.mxu0 %v228
    %1008 = vmatmul.mubr.bf16.gmra.mrb[0].mxu0 %v226
    %v1009 = vpop.f32.mrb[0].mxu0
    %v1010 = vadd.f32 %v970, %v1009
    %v1011 = vpop.f32.mrb[0].mxu0
    %v1012 = vpop.f32.mrb[0].mxu0
    %v1013 = vpop.f32.mrb[0].mxu0
    %1014 = vdwg.mxu0
    %1015 = vmatprep.subr.bf16.mxu0 %v684
    %1016 = vmatpush1.bf16.xpose.msra.mxu0 %v683
    %1017 = vmatprep.subr.bf16.mxu0 %v700
    %1018 = vmatpush1.bf16.xpose.msra.mxu0 %v699
    %1019 = vmatprep.subr.bf16.mxu0 %v716
    %1020 = vmatpush1.bf16.xpose.msra.mxu0 %v715
    %1021 = vmatprep.subr.bf16.mxu0 %v732
    %1022 = vmatpush1.bf16.xpose.msra.mxu0 %v731
    %1023 = vmatprep.subr.bf16.mxu0 %v748
    %1024 = vmatpush1.bf16.xpose.msra.mxu0 %v747
    %1025 = vmatprep.subr.bf16.mxu0 %v764
    %1026 = vmatpush1.bf16.xpose.msra.mxu0 %v763
    %1027 = vmatprep.subr.bf16.mxu0 %v780
    %1028 = vmatpush1.bf16.xpose.msra.mxu0 %v779
    %1029 = vmatprep.subr.bf16.mxu0 %v796
    %1030 = vmatpush1.bf16.xpose.msra.mxu0 %v795
    %1031 = vmatprep.subr.bf16.mxu0 0
    %1032 = vmatpush1.bf16.xpose.msra.mxu0 0
    %1033 = vmatprep.subr.bf16.mxu0 0
    %1034 = vmatpush1.bf16.xpose.msra.mxu0 0
    %1035 = vmatprep.subr.bf16.mxu0 0
    %1036 = vmatpush1.bf16.xpose.msra.mxu0 0
    %1037 = vmatprep.subr.bf16.mxu0 0
    %1038 = vmatpush1.bf16.xpose.msra.mxu0 0
    %1039 = vmatprep.subr.bf16.mxu0 0
    %1040 = vmatpush1.bf16.xpose.msra.mxu0 0
    %1041 = vmatprep.subr.bf16.mxu0 0
    %1042 = vmatpush1.bf16.xpose.msra.mxu0 0
    %1043 = vmatprep.subr.bf16.mxu0 0
    %1044 = vmatpush1.bf16.xpose.msra.mxu0 0
    %1045 = vmatprep.subr.bf16.mxu0 0
    %1046 = vmatpush1.bf16.xpose.msra.mxu0 0
    %1047 = vmatprep.mubr.bf16.mxu0 %v225
    %1048 = vmatmul.mubr.bf16.gmra.mrb[0].mxu0 %v211
    %v1049 = vpop.f32.mrb[0].mxu0
    %v1050 = vadd.f32 %v1010, %v1049
    %v1051 = vpop.f32.mrb[0].mxu0
    %v1052 = vpop.f32.mrb[0].mxu0
    %v1053 = vpop.f32.mrb[0].mxu0
    %1054 = vdwg.mxu0
    %1055 = vmatprep.subr.bf16.mxu0 %v686
    %1056 = vmatpush1.bf16.xpose.msra.mxu0 %v685
    %1057 = vmatprep.subr.bf16.mxu0 %v702
    %1058 = vmatpush1.bf16.xpose.msra.mxu0 %v701
    %1059 = vmatprep.subr.bf16.mxu0 %v718
    %1060 = vmatpush1.bf16.xpose.msra.mxu0 %v717
    %1061 = vmatprep.subr.bf16.mxu0 %v734
    %1062 = vmatpush1.bf16.xpose.msra.mxu0 %v733
    %1063 = vmatprep.subr.bf16.mxu0 %v750
    %1064 = vmatpush1.bf16.xpose.msra.mxu0 %v749
    %1065 = vmatprep.subr.bf16.mxu0 %v766
    %1066 = vmatpush1.bf16.xpose.msra.mxu0 %v765
    %1067 = vmatprep.subr.bf16.mxu0 %v782
    %1068 = vmatpush1.bf16.xpose.msra.mxu0 %v781
    %1069 = vmatprep.subr.bf16.mxu0 %v798
    %1070 = vmatpush1.bf16.xpose.msra.mxu0 %v797
    %1071 = vmatprep.subr.bf16.mxu0 0
    %1072 = vmatpush1.bf16.xpose.msra.mxu0 0
    %1073 = vmatprep.subr.bf16.mxu0 0
    %1074 = vmatpush1.bf16.xpose.msra.mxu0 0
    %1075 = vmatprep.subr.bf16.mxu0 0
    %1076 = vmatpush1.bf16.xpose.msra.mxu0 0
    %1077 = vmatprep.subr.bf16.mxu0 0
    %1078 = vmatpush1.bf16.xpose.msra.mxu0 0
    %1079 = vmatprep.subr.bf16.mxu0 0
    %1080 = vmatpush1.bf16.xpose.msra.mxu0 0
    %1081 = vmatprep.subr.bf16.mxu0 0
    %1082 = vmatpush1.bf16.xpose.msra.mxu0 0
    %1083 = vmatprep.subr.bf16.mxu0 0
    %1084 = vmatpush1.bf16.xpose.msra.mxu0 0
    %1085 = vmatprep.subr.bf16.mxu0 0
    %1086 = vmatpush1.bf16.xpose.msra.mxu0 0
    %1087 = vmatprep.mubr.bf16.mxu0 %v229
    %1088 = vmatmul.mubr.bf16.gmra.mrb[0].mxu0 %v227
    %v1089 = vpop.f32.mrb[0].mxu0
    %v1090 = vadd.f32 %v1050, %v1089
    %v1091 = vpop.f32.mrb[0].mxu0
    %v1092 = vpop.f32.mrb[0].mxu0
    %v1093 = vpop.f32.mrb[0].mxu0
    %1094 = vdwg.mxu0
    %1095 = vmatprep.subr.bf16.mxu0 %v688
    %1096 = vmatpush1.bf16.xpose.msra.mxu0 %v687
    %1097 = vmatprep.subr.bf16.mxu0 %v704
    %1098 = vmatpush1.bf16.xpose.msra.mxu0 %v703
    %1099 = vmatprep.subr.bf16.mxu0 %v720
    %1100 = vmatpush1.bf16.xpose.msra.mxu0 %v719
    %1101 = vmatprep.subr.bf16.mxu0 %v736
    %1102 = vmatpush1.bf16.xpose.msra.mxu0 %v735
    %1103 = vmatprep.subr.bf16.mxu0 %v752
    %1104 = vmatpush1.bf16.xpose.msra.mxu0 %v751
    %1105 = vmatprep.subr.bf16.mxu0 %v768
    %1106 = vmatpush1.bf16.xpose.msra.mxu0 %v767
    %1107 = vmatprep.subr.bf16.mxu0 %v784
    %1108 = vmatpush1.bf16.xpose.msra.mxu0 %v783
    %1109 = vmatprep.subr.bf16.mxu0 %v800
    %1110 = vmatpush1.bf16.xpose.msra.mxu0 %v799
    %1111 = vmatprep.subr.bf16.mxu0 0
    %1112 = vmatpush1.bf16.xpose.msra.mxu0 0
    %1113 = vmatprep.subr.bf16.mxu0 0
    %1114 = vmatpush1.bf16.xpose.msra.mxu0 0
    %1115 = vmatprep.subr.bf16.mxu0 0
    %1116 = vmatpush1.bf16.xpose.msra.mxu0 0
    %1117 = vmatprep.subr.bf16.mxu0 0
    %1118 = vmatpush1.bf16.xpose.msra.mxu0 0
    %1119 = vmatprep.subr.bf16.mxu0 0
    %1120 = vmatpush1.bf16.xpose.msra.mxu0 0
    %1121 = vmatprep.subr.bf16.mxu0 0
    %1122 = vmatpush1.bf16.xpose.msra.mxu0 0
    %1123 = vmatprep.subr.bf16.mxu0 0
    %1124 = vmatpush1.bf16.xpose.msra.mxu0 0
    %1125 = vmatprep.subr.bf16.mxu0 0
    %1126 = vmatpush1.bf16.xpose.msra.mxu0 0
    %1127 = vmatprep.mubr.bf16.mxu0 %v267
    %1128 = vmatmul.mubr.bf16.gmra.mrb[0].mxu0 %v253
    %v1129 = vpop.f32.mrb[0].mxu0
    %v1130 = vadd.f32 %v1090, %v1129
    %v1131 = vpop.f32.mrb[0].mxu0
    %v1132 = vpop.f32.mrb[0].mxu0
    %v1133 = vpop.f32.mrb[0].mxu0
    %1134 = vdwg.mxu0
    %1135 = vmatprep.subr.bf16.mxu0 %v690
    %1136 = vmatpush1.bf16.xpose.msra.mxu0 %v689
    %1137 = vmatprep.subr.bf16.mxu0 %v706
    %1138 = vmatpush1.bf16.xpose.msra.mxu0 %v705
    %1139 = vmatprep.subr.bf16.mxu0 %v722
    %1140 = vmatpush1.bf16.xpose.msra.mxu0 %v721
    %1141 = vmatprep.subr.bf16.mxu0 %v738
    %1142 = vmatpush1.bf16.xpose.msra.mxu0 %v737
    %1143 = vmatprep.subr.bf16.mxu0 %v754
    %1144 = vmatpush1.bf16.xpose.msra.mxu0 %v753
    %1145 = vmatprep.subr.bf16.mxu0 %v770
    %1146 = vmatpush1.bf16.xpose.msra.mxu0 %v769
    %1147 = vmatprep.subr.bf16.mxu0 %v786
    %1148 = vmatpush1.bf16.xpose.msra.mxu0 %v785
    %1149 = vmatprep.subr.bf16.mxu0 %v802
    %1150 = vmatpush1.bf16.xpose.msra.mxu0 %v801
    %1151 = vmatprep.subr.bf16.mxu0 0
    %1152 = vmatpush1.bf16.xpose.msra.mxu0 0
    %1153 = vmatprep.subr.bf16.mxu0 0
    %1154 = vmatpush1.bf16.xpose.msra.mxu0 0
    %1155 = vmatprep.subr.bf16.mxu0 0
    %1156 = vmatpush1.bf16.xpose.msra.mxu0 0
    %1157 = vmatprep.subr.bf16.mxu0 0
    %1158 = vmatpush1.bf16.xpose.msra.mxu0 0
    %1159 = vmatprep.subr.bf16.mxu0 0
    %1160 = vmatpush1.bf16.xpose.msra.mxu0 0
    %1161 = vmatprep.subr.bf16.mxu0 0
    %1162 = vmatpush1.bf16.xpose.msra.mxu0 0
    %1163 = vmatprep.subr.bf16.mxu0 0
    %1164 = vmatpush1.bf16.xpose.msra.mxu0 0
    %1165 = vmatprep.subr.bf16.mxu0 0
    %1166 = vmatpush1.bf16.xpose.msra.mxu0 0
    %1167 = vmatprep.mubr.bf16.mxu0 %v277
    %1168 = vmatmul.mubr.bf16.gmra.mrb[0].mxu0 %v275
    %v1169 = vpop.f32.mrb[0].mxu0
    %v1170 = vadd.f32 %v1130, %v1169
    %v1171 = vpop.f32.mrb[0].mxu0
    %v1172 = vpop.f32.mrb[0].mxu0
    %v1173 = vpop.f32.mrb[0].mxu0
    %1174 = vdwg.mxu0
    %1175 = vmatprep.subr.bf16.mxu0 %v692
    %1176 = vmatpush1.bf16.xpose.msra.mxu0 %v691
    %1177 = vmatprep.subr.bf16.mxu0 %v708
    %1178 = vmatpush1.bf16.xpose.msra.mxu0 %v707
    %1179 = vmatprep.subr.bf16.mxu0 %v724
    %1180 = vmatpush1.bf16.xpose.msra.mxu0 %v723
    %1181 = vmatprep.subr.bf16.mxu0 %v740
    %1182 = vmatpush1.bf16.xpose.msra.mxu0 %v739
    %1183 = vmatprep.subr.bf16.mxu0 %v756
    %1184 = vmatpush1.bf16.xpose.msra.mxu0 %v755
    %1185 = vmatprep.subr.bf16.mxu0 %v772
    %1186 = vmatpush1.bf16.xpose.msra.mxu0 %v771
    %1187 = vmatprep.subr.bf16.mxu0 %v788
    %1188 = vmatpush1.bf16.xpose.msra.mxu0 %v787
    %1189 = vmatprep.subr.bf16.mxu0 %v804
    %1190 = vmatpush1.bf16.xpose.msra.mxu0 %v803
    %1191 = vmatprep.subr.bf16.mxu0 0
    %1192 = vmatpush1.bf16.xpose.msra.mxu0 0
    %1193 = vmatprep.subr.bf16.mxu0 0
    %1194 = vmatpush1.bf16.xpose.msra.mxu0 0
    %1195 = vmatprep.subr.bf16.mxu0 0
    %1196 = vmatpush1.bf16.xpose.msra.mxu0 0
    %1197 = vmatprep.subr.bf16.mxu0 0
    %1198 = vmatpush1.bf16.xpose.msra.mxu0 0
    %1199 = vmatprep.subr.bf16.mxu0 0
    %1200 = vmatpush1.bf16.xpose.msra.mxu0 0
    %1201 = vmatprep.subr.bf16.mxu0 0
    %1202 = vmatpush1.bf16.xpose.msra.mxu0 0
    %1203 = vmatprep.subr.bf16.mxu0 0
    %1204 = vmatpush1.bf16.xpose.msra.mxu0 0
    %1205 = vmatprep.subr.bf16.mxu0 0
    %1206 = vmatpush1.bf16.xpose.msra.mxu0 0
    %1207 = vmatprep.mubr.bf16.mxu0 %v274
    %1208 = vmatmul.mubr.bf16.gmra.mrb[0].mxu0 %v260
    %v1209 = vpop.f32.mrb[0].mxu0
    %v1210 = vadd.f32 %v1170, %v1209
    %v1211 = vpop.f32.mrb[0].mxu0
    %v1212 = vpop.f32.mrb[0].mxu0
    %v1213 = vpop.f32.mrb[0].mxu0
    %1214 = vdwg.mxu0
    %1215 = vmatprep.subr.bf16.mxu0 %v694
    %1216 = vmatpush1.bf16.xpose.msra.mxu0 %v693
    %1217 = vmatprep.subr.bf16.mxu0 %v710
    %1218 = vmatpush1.bf16.xpose.msra.mxu0 %v709
    %1219 = vmatprep.subr.bf16.mxu0 %v726
    %1220 = vmatpush1.bf16.xpose.msra.mxu0 %v725
    %1221 = vmatprep.subr.bf16.mxu0 %v742
    %1222 = vmatpush1.bf16.xpose.msra.mxu0 %v741
    %1223 = vmatprep.subr.bf16.mxu0 %v758
    %1224 = vmatpush1.bf16.xpose.msra.mxu0 %v757
    %1225 = vmatprep.subr.bf16.mxu0 %v774
    %1226 = vmatpush1.bf16.xpose.msra.mxu0 %v773
    %1227 = vmatprep.subr.bf16.mxu0 %v790
    %1228 = vmatpush1.bf16.xpose.msra.mxu0 %v789
    %1229 = vmatprep.subr.bf16.mxu0 %v806
    %1230 = vmatpush1.bf16.xpose.msra.mxu0 %v805
    %1231 = vmatprep.subr.bf16.mxu0 0
    %1232 = vmatpush1.bf16.xpose.msra.mxu0 0
    %1233 = vmatprep.subr.bf16.mxu0 0
    %1234 = vmatpush1.bf16.xpose.msra.mxu0 0
    %1235 = vmatprep.subr.bf16.mxu0 0
    %1236 = vmatpush1.bf16.xpose.msra.mxu0 0
    %1237 = vmatprep.subr.bf16.mxu0 0
    %1238 = vmatpush1.bf16.xpose.msra.mxu0 0
    %1239 = vmatprep.subr.bf16.mxu0 0
    %1240 = vmatpush1.bf16.xpose.msra.mxu0 0
    %1241 = vmatprep.subr.bf16.mxu0 0
    %1242 = vmatpush1.bf16.xpose.msra.mxu0 0
    %1243 = vmatprep.subr.bf16.mxu0 0
    %1244 = vmatpush1.bf16.xpose.msra.mxu0 0
    %1245 = vmatprep.subr.bf16.mxu0 0
    %1246 = vmatpush1.bf16.xpose.msra.mxu0 0
    %1247 = vmatprep.mubr.bf16.mxu0 %v278
    %1248 = vmatmul.mubr.bf16.gmra.mrb[0].mxu0 %v276
    %v1249 = vpop.f32.mrb[0].mxu0
    %v1250 = vadd.f32 %v1210, %v1249
    %v1251 = vpop.f32.mrb[0].mxu0
    %v1252 = vpop.f32.mrb[0].mxu0
    %v1253 = vpop.f32.mrb[0].mxu0
    %1254 = vdwg.mxu0
    %vm1255 = vcmask 1041408
    %v1256 = vsel %vm1255, %v1250, -inf
    %1257 = vmax.xlane.f32.xlu0 %v1256
    %v1258 = vpop.xlane.xlu0 %1257
    %v1259 = vsub.f32 %v1250, %v1258
    %v1260 = vmul.f32 %v1259, 1.442695
    %v1261 = vpow.pop %v1260
    %v1262 = vsel %vm1255, %v1261, 0.0
    %1263 = vadd.xlane.f32.xlu0 %v1262
    %v1264 = vpop.xlane.xlu0 %1263
    %v1265 = vlog2.pop %v1264
    %v1266 = vmul.f32 %v1265, 0.6931472
    %v1267 = vsub.f32 %v1259, %v1266
    %1268 = vst [vmem:[#allocation7] sm:$0x3] %v1267
    // Predicated region
    $region22: #{tpu_custom_call.1} parent=1 // pred_check
      _
    $region23: #{tpu_custom_call.1} parent=1 // pred_check_branch
      %1270 = sbr.rel (0) target = $region25
    $region24: #{tpu_custom_call.1} parent=1 // pred_region
      %s1272 = ssub.s32 32, 32
      %1273 = vsyncadd [#allocation4], %s1272
      %s1275 = sshll.u32 [#allocation7], 4
      %s1276 = int_to_ptr.vmem [resolvable:$true] %s1275
      %1278 = dma.vmem_to_hbm [thread:$0]  %s1276, 32, %s3, [#allocation4]
    $region25: #{tpu_custom_call.1} parent=1 // pred_fallthru
      _
    // Predicated region
    $region26: #{tpu_custom_call.1} parent=1 // pred_check
      _
    $region27: #{tpu_custom_call.1} parent=1 // pred_check_branch
      %1280 = sbr.rel (0) target = $region29
    $region28: #{tpu_custom_call.1} parent=1 // pred_region
      %1281 = dma.done [#allocation4], 32
    $region29: #{tpu_custom_call.1} parent=1 // pred_fallthru
      _
    %1282 = vsyncpa [#allocation3], 1
    %1283 = vsyncpa [#allocation6], 1
    %1284 = vsyncpa [#allocation4], 1

</llo_original>
